<compile_context>
chip_gen: v5e
topology: v5e:2x2
jax: 0.10.0
libtpu: 0.0.40
codegen_flags: <defaults>
</compile_context>

<pallas_src>
import numpy as np
import jax
import jax.numpy as jnp
from jax.experimental import pallas as pl
from jax.experimental.pallas import tpu as pltpu


# --------------------------------------------------------------------------------------
# Gaussian taps (what the PyTorch module bakes into its depthwise conv weights)
# --------------------------------------------------------------------------------------
def _gaussian_taps_sigma1():
    """Closed-form 1-D taps (a, b, a) of scipy.ndimage.gaussian_filter(delta_3, sigma=1)."""
    w = np.exp(-0.5 * np.arange(-4, 5).astype(np.float64) ** 2)
    w /= w.sum()
    wd = {i: w[i + 4] for i in range(-4, 9 - 4)}
    a = wd[1] + wd[2] + wd[4]   # value at positions 0 and 2
    b = wd[0] + 2.0 * wd[3]     # value at the center position
    return float(a), float(b)


def _scipy_like_gaussian_3x3(sigma=1.0, truncate=4.0):
    """Independent numpy emulation of scipy.ndimage.gaussian_filter on a 3x3 delta
    (default mode='reflect', truncate=4), i.e. the actual module weights."""
    radius = int(truncate * sigma + 0.5)
    offs = np.arange(-radius, radius + 1)
    w = np.exp(-0.5 * (offs / sigma) ** 2)
    w = w / w.sum()

    def reflect(idx, n):
        while idx < 0 or idx >= n:
            idx = -idx - 1 if idx < 0 else 2 * n - idx - 1
        return idx

    def corr1d(sig):
        n = len(sig)
        return np.array([sum(wj * sig[reflect(i + o, n)] for o, wj in zip(offs, w))
                         for i in range(n)], dtype=np.float64)

    d = np.zeros((3, 3), dtype=np.float64)
    d[1, 1] = 1.0
    tmp = np.stack([corr1d(d[:, c]) for c in range(3)], axis=1)   # filter rows
    out = np.stack([corr1d(tmp[r, :]) for r in range(3)], axis=0)  # filter cols
    return out.astype(np.float32)


# --------------------------------------------------------------------------------------
# Kernel
# --------------------------------------------------------------------------------------
def _embed_rows(x, top, total):
    """Place x at row offset `top` inside `total` rows, zeros elsewhere."""
    bs, h, w = x.shape
    pieces = []
    if top > 0:
        pieces.append(jnp.zeros((bs, top, w), x.dtype))
    pieces.append(x)
    bot = total - top - h
    if bot > 0:
        pieces.append(jnp.zeros((bs, bot, w), x.dtype))
    return jnp.concatenate(pieces, axis=1) if len(pieces) > 1 else pieces[0]


def _embed_cols(v, left, total):
    """Place v at column offset `left` inside `total` columns, zeros elsewhere."""
    bs, h, w = v.shape
    pieces = []
    if left > 0:
        pieces.append(jnp.zeros((bs, h, left), v.dtype))
    pieces.append(v)
    right = total - left - w
    if right > 0:
        pieces.append(jnp.zeros((bs, h, right), v.dtype))
    return jnp.concatenate(pieces, axis=2) if len(pieces) > 1 else pieces[0]


def _make_kernel(H, W, HP, WP, a, b):
    """Fused reflection-pad(2) + separable (a,b,a)x(a,b,a) conv.

    Output block element o[m, n] holds the 3x3 stencil of the reflection-padded input
    centered at padded position (m, n); the logical result is o[1:H+3, 1:W+3].
    """
    a = float(a)
    b = float(b)

    def kernel(x_ref, o_ref):
        f32 = jnp.float32
        x = x_ref[...].astype(f32)                       # (BS, H, W)

        # ---------- vertical (sublane) 3-tap with fused row reflection ----------
        # Zero-padded part: vr[m] = a*x[m-1] + b*x[m-2] + a*x[m-3]
        e1 = _embed_rows(x, 1, HP)                       # row m holds x[m-1]
        e2 = _embed_rows(x, 2, HP)                       # row m holds x[m-2]
        e3 = _embed_rows(x, 3, HP)                       # row m holds x[m-3]
        vr = a * (e1 + e3) + b * e2                      # (BS, HP, W)

        # Reflection fixups on the 4 boundary rows (output rows 1, 2, H+1, H+2).
        x1 = x[:, 1:2, :]
        x2 = x[:, 2:3, :]
        xs = x[:, H - 3:H - 2, :]
        xt = x[:, H - 2:H - 1, :]
        ridx = jax.lax.broadcasted_iota(jnp.int32, (1, HP, 1), 1)
        vr = (vr
              + jnp.where(ridx == 1, a * x2 + b * x1, 0.0)
              + jnp.where(ridx == 2, a * x1, 0.0)
              + jnp.where(ridx == H + 1, a * xt, 0.0)
              + jnp.where(ridx == H + 2, b * xt + a * xs, 0.0))

        # ---------- horizontal (lane) 3-tap with fused column reflection ----------
        vp = _embed_cols(vr, 2, WP)                      # (BS, HP, WP), data at cols 2..W+1
        # symmetric +/-1 lane rotation (zeros wrap around, so circular == zero-padded)
        o = a * (pltpu.roll(vp, shift=1, axis=2) +
                 pltpu.roll(vp, shift=WP - 1, axis=2)) + b * vp

        p3 = vr[:, :, 1:2]            # vertically filtered column x[:,1]
        p4 = vr[:, :, 2:3]            # vertically filtered column x[:,2]
        pw = vr[:, :, W - 2:W - 1]    # vertically filtered column x[:,W-2]
        pv = vr[:, :, W - 3:W - 2]    # vertically filtered column x[:,W-3]
        cidx = jax.lax.broadcasted_iota(jnp.int32, (1, 1, WP), 2)
        o = (o
             + jnp.where(cidx == 1, a * p4 + b * p3, 0.0)
             + jnp.where(cidx == 2, a * p3, 0.0)
             + jnp.where(cidx == W + 1, a * pw, 0.0)
             + jnp.where(cidx == W + 2, b * pw + a * pv, 0.0))

        o_ref[...] = o.astype(o_ref.dtype)               # full dense (8,128)-aligned store

    return kernel


# --------------------------------------------------------------------------------------
# Wrapper
# --------------------------------------------------------------------------------------
def _round_up(v, m):
    return ((v + m - 1) // m) * m


def _largest_divisor_at_most(n, cap):
    cap = max(1, min(n, cap))
    for d in range(cap, 0, -1):
        if n % d == 0:
            return d
    return 1


def _tpu_caps():
    """(physical VMEM bytes, TensorCores per chip) with conservative fallbacks."""
    vmem = 128 * 1024 * 1024
    cores = 1
    try:
        info = pltpu.get_tpu_info()
        v = getattr(info, "vmem_capacity_bytes", None)
        if v:
            vmem = int(v)
        for attr in ("num_cores", "num_tensorcores", "tensorcores_per_chip", "cores_per_chip"):
            c = getattr(info, attr, None)
            if c:
                cores = max(cores, int(c))
                break
    except Exception:
        pass
    return vmem, cores


def gaussian_layer(x):
    """ReflectionPad2d(2) + depthwise 3x3 Gaussian conv (groups=3, no bias).

    x: (N, 3, H, W) -> (N, 3, H+2, W+2). dtype is preserved (f32 math inside).
    """
    N, C, H, W = x.shape
    assert C == 3, "GaussianLayer expects 3 input channels"
    assert H >= 3 and W >= 3, "ReflectionPad2d(2) needs spatial dims >= 3"

    Ho, Wo = H + 2, W + 2
    NC = N * C
    # Lane/sublane-dense output block; valid region lives at [1:Ho+1, 1:Wo+1].
    HP = _round_up(H + 3, 8)
    WP = _round_up(W + 3, 128)

    xf = x.reshape(NC, H, W)            # free metadata reshape (NCHW is contiguous)
    isz = jnp.dtype(x.dtype).itemsize

    # ---- generation-aware block sizing --------------------------------------
    phys_vmem, n_cores = _tpu_caps()
    vmem_limit = int(min(64 * 1024 * 1024, phys_vmem * 3 // 4))   # ~48 MiB on v7x, 64 MiB else
    budget = min(vmem_limit // 2, 32 * 1024 * 1024)
    # Double-buffered in/out blocks plus ~4 f32 in-kernel intermediates of each size.
    per_slab = isz * 2 * (H * W + HP * WP) + 4 * 4 * (HP * W + HP * WP)
    bs = _largest_divisor_at_most(NC, max(1, budget // max(per_slab, 1)))
    if n_cores >= 2 and NC > 1 and NC // bs < 2:
        bs = _largest_divisor_at_most(NC, max(1, NC // 2))        # give both TCs work
    grid = (NC // bs,)
    # TODO(synk): for full-res slabs (HP*WP f32 of several MiB) tile H into row strips with a
    # 2-row halo so blocks stay in the DMA sweet spot and fit v7x's 64 MiB VMEM.
    # TODO(synk): if production W stays << 128, pack several slabs side-by-side along the lane
    # axis to recover lane/DMA efficiency for the input reads.

    a, b = _gaussian_taps_sigma1()

    out = pl.pallas_call(
        _make_kernel(H, W, HP, WP, a, b),
        out_shape=jax.ShapeDtypeStruct((NC, HP, WP), x.dtype),
        grid_spec=pltpu.PrefetchScalarGridSpec(
            num_scalar_prefetch=0,
            grid=grid,
            in_specs=[pl.BlockSpec((bs, H, W), lambda i: (i, 0, 0))],
            out_specs=pl.BlockSpec((bs, HP, WP), lambda i: (i, 0, 0)),
        ),
        compiler_params=pltpu.CompilerParams(
            dimension_semantics=("parallel",),
            vmem_limit_bytes=vmem_limit,
        ),
        cost_estimate=pl.CostEstimate(
            flops=12 * NC * Ho * Wo,                      # 6 MAC/elem (separable 3-tap x2)
            transcendentals=0,
            bytes_accessed=isz * NC * (H * W + HP * WP),
        ),
    )(xf)

    # Crop the dense padded slab back to the logical (Ho, Wo) output.
    # (A consumer that accepts the padded slab directly should skip this crop.)
    return out[:, 1:Ho + 1, 1:Wo + 1].reshape(N, C, Ho, Wo)


# --------------------------------------------------------------------------------------
# Pure-JAX reference + self-test
# --------------------------------------------------------------------------------------
def _reference(x):
    """Depthwise 3x3 VALID conv on the reflection-padded input, with weights built by an
    independent emulation of the module's scipy-based initialization."""
    k = jnp.asarray(_scipy_like_gaussian_3x3())
    w = jnp.broadcast_to(k, (3, 1, 3, 3))                 # OIHW, feature_group_count=3
    xp = jnp.pad(x, ((0, 0), (0, 0), (2, 2), (2, 2)), mode="reflect")
    return jax.lax.conv_general_dilated(
        xp, w, window_strides=(1, 1), padding="VALID",
        dimension_numbers=("NCHW", "OIHW", "NCHW"), feature_group_count=3)


if __name__ == "__main__":
    key = jax.random.PRNGKey(0)
    x = jax.random.normal(key, (2, 3, 16, 16), dtype=jnp.float32)

    # Closed-form separable taps must match the scipy-style weight construction.
    a, b = _gaussian_taps_sigma1()
    np.testing.assert_allclose(
        np.outer([a, b, a], [a, b, a]).astype(np.float32),
        _scipy_like_gaussian_3x3(), rtol=1e-5, atol=1e-6)

    y = jax.block_until_ready(gaussian_layer(x))
    assert y.shape == (2, 3, 18, 18), y.shape
    y_ref = jax.block_until_ready(_reference(x))
    np.testing.assert_allclose(np.asarray(y), np.asarray(y_ref), rtol=1e-5, atol=1e-5)

    # Non-multiple-of-8 spatial size exercises the boundary fixup paths.
    x2 = jax.random.normal(jax.random.PRNGKey(1), (1, 3, 13, 20), dtype=jnp.float32)
    y2 = jax.block_until_ready(gaussian_layer(x2))
    y2_ref = jax.block_until_ready(_reference(x2))
    assert y2.shape == (1, 3, 15, 22), y2.shape
    np.testing.assert_allclose(np.asarray(y2), np.asarray(y2_ref), rtol=1e-5, atol=1e-5)

    print("KERNEL_OK")
</pallas_src>

<mosaic_0001>
module attributes {stable_mosaic.version = 11 : i64} {
  func.func @kernel(%arg0: i32, %arg1: memref<6x16x16xf32, #tpu.memory_space<vmem>>, %arg2: memref<6x24x128xf32, #tpu.memory_space<vmem>>) attributes {dimension_semantics = [#tpu.dimension_semantics<parallel>], iteration_bounds = array<i64: 1>, scalar_prefetch = 0 : i64, scratch_operands = 0 : i64, tpu.core_type = #tpu.core_type<tc>, window_params = [{transform_indices = @transform_0, window_bounds = array<i64: 6, 16, 16>}, {transform_indices = @transform_1, window_bounds = array<i64: 6, 24, 128>}]} {
    %c0 = arith.constant 0 : index
    %c0_0 = arith.constant 0 : index
    %c0_1 = arith.constant 0 : index
    %0 = vector.load %arg1[%c0, %c0_0, %c0_1] : memref<6x16x16xf32, #tpu.memory_space<vmem>>, vector<6x16x16xf32>
    %cst = arith.constant 0.000000e+00 : f32
    %1 = vector.broadcast %cst : f32 to vector<6x1x16xf32>
    %cst_2 = arith.constant 0.000000e+00 : f32
    %2 = vector.broadcast %cst_2 : f32 to vector<6x7x16xf32>
    %3 = tpu.concatenate %1, %0, %2 in 1 : vector<6x1x16xf32>, vector<6x16x16xf32>, vector<6x7x16xf32> -> vector<6x24x16xf32>
    %cst_3 = arith.constant 0.000000e+00 : f32
    %4 = vector.broadcast %cst_3 : f32 to vector<6x2x16xf32>
    %cst_4 = arith.constant 0.000000e+00 : f32
    %5 = vector.broadcast %cst_4 : f32 to vector<6x6x16xf32>
    %6 = tpu.concatenate %4, %0, %5 in 1 : vector<6x2x16xf32>, vector<6x16x16xf32>, vector<6x6x16xf32> -> vector<6x24x16xf32>
    %cst_5 = arith.constant 0.000000e+00 : f32
    %7 = vector.broadcast %cst_5 : f32 to vector<6x3x16xf32>
    %cst_6 = arith.constant 0.000000e+00 : f32
    %8 = vector.broadcast %cst_6 : f32 to vector<6x5x16xf32>
    %9 = tpu.concatenate %7, %0, %8 in 1 : vector<6x3x16xf32>, vector<6x16x16xf32>, vector<6x5x16xf32> -> vector<6x24x16xf32>
    %10 = arith.addf %3, %9 : vector<6x24x16xf32>
    %cst_7 = arith.constant 0.296096414 : f32
    %11 = vector.broadcast %cst_7 : f32 to vector<6x24x16xf32>
    %12 = arith.mulf %11, %10 : vector<6x24x16xf32>
    %cst_8 = arith.constant 0.407807201 : f32
    %13 = vector.broadcast %cst_8 : f32 to vector<6x24x16xf32>
    %14 = arith.mulf %13, %6 : vector<6x24x16xf32>
    %15 = arith.addf %12, %14 : vector<6x24x16xf32>
    %16 = vector.extract_strided_slice %0 {offsets = [0, 1, 0], sizes = [6, 1, 16], strides = [1, 1, 1]} : vector<6x16x16xf32> to vector<6x1x16xf32>
    %17 = vector.extract_strided_slice %0 {offsets = [0, 2, 0], sizes = [6, 1, 16], strides = [1, 1, 1]} : vector<6x16x16xf32> to vector<6x1x16xf32>
    %18 = vector.extract_strided_slice %0 {offsets = [0, 13, 0], sizes = [6, 1, 16], strides = [1, 1, 1]} : vector<6x16x16xf32> to vector<6x1x16xf32>
    %19 = vector.extract_strided_slice %0 {offsets = [0, 14, 0], sizes = [6, 1, 16], strides = [1, 1, 1]} : vector<6x16x16xf32> to vector<6x1x16xf32>
    %20 = tpu.iota {dimensions = array<i32: 1>} : vector<1x24x1xi32>
    %c1_i32 = arith.constant 1 : i32
    %21 = vector.broadcast %c1_i32 : i32 to vector<1x24x1xi32>
    %22 = arith.cmpi eq, %20, %21 : vector<1x24x1xi32>
    %cst_9 = arith.constant 0.296096414 : f32
    %23 = vector.broadcast %cst_9 : f32 to vector<6x1x16xf32>
    %24 = arith.mulf %23, %17 : vector<6x1x16xf32>
    %cst_10 = arith.constant 0.407807201 : f32
    %25 = vector.broadcast %cst_10 : f32 to vector<6x1x16xf32>
    %26 = arith.mulf %25, %16 : vector<6x1x16xf32>
    %27 = arith.addf %24, %26 : vector<6x1x16xf32>
    %cst_11 = arith.constant 0.000000e+00 : f32
    %28 = vector.shape_cast %22 : vector<1x24x1xi1> to vector<1x24x1xi1>
    %29 = vector.broadcast %28 : vector<1x24x1xi1> to vector<6x24x16xi1>
    %30 = vector.shape_cast %27 : vector<6x1x16xf32> to vector<6x1x16xf32>
    %31 = vector.broadcast %30 : vector<6x1x16xf32> to vector<6x24x16xf32>
    %32 = vector.broadcast %cst_11 : f32 to vector<6x24x16xf32>
    %33 = arith.select %29, %31, %32 : vector<6x24x16xi1>, vector<6x24x16xf32>
    %34 = arith.addf %15, %33 : vector<6x24x16xf32>
    %c2_i32 = arith.constant 2 : i32
    %35 = vector.broadcast %c2_i32 : i32 to vector<1x24x1xi32>
    %36 = arith.cmpi eq, %20, %35 : vector<1x24x1xi32>
    %cst_12 = arith.constant 0.296096414 : f32
    %37 = vector.broadcast %cst_12 : f32 to vector<6x1x16xf32>
    %38 = arith.mulf %37, %16 : vector<6x1x16xf32>
    %cst_13 = arith.constant 0.000000e+00 : f32
    %39 = vector.shape_cast %36 : vector<1x24x1xi1> to vector<1x24x1xi1>
    %40 = vector.broadcast %39 : vector<1x24x1xi1> to vector<6x24x16xi1>
    %41 = vector.shape_cast %38 : vector<6x1x16xf32> to vector<6x1x16xf32>
    %42 = vector.broadcast %41 : vector<6x1x16xf32> to vector<6x24x16xf32>
    %43 = vector.broadcast %cst_13 : f32 to vector<6x24x16xf32>
    %44 = arith.select %40, %42, %43 : vector<6x24x16xi1>, vector<6x24x16xf32>
    %45 = arith.addf %34, %44 : vector<6x24x16xf32>
    %c17_i32 = arith.constant 17 : i32
    %46 = vector.broadcast %c17_i32 : i32 to vector<1x24x1xi32>
    %47 = arith.cmpi eq, %20, %46 : vector<1x24x1xi32>
    %cst_14 = arith.constant 0.296096414 : f32
    %48 = vector.broadcast %cst_14 : f32 to vector<6x1x16xf32>
    %49 = arith.mulf %48, %19 : vector<6x1x16xf32>
    %cst_15 = arith.constant 0.000000e+00 : f32
    %50 = vector.shape_cast %47 : vector<1x24x1xi1> to vector<1x24x1xi1>
    %51 = vector.broadcast %50 : vector<1x24x1xi1> to vector<6x24x16xi1>
    %52 = vector.shape_cast %49 : vector<6x1x16xf32> to vector<6x1x16xf32>
    %53 = vector.broadcast %52 : vector<6x1x16xf32> to vector<6x24x16xf32>
    %54 = vector.broadcast %cst_15 : f32 to vector<6x24x16xf32>
    %55 = arith.select %51, %53, %54 : vector<6x24x16xi1>, vector<6x24x16xf32>
    %56 = arith.addf %45, %55 : vector<6x24x16xf32>
    %c18_i32 = arith.constant 18 : i32
    %57 = vector.broadcast %c18_i32 : i32 to vector<1x24x1xi32>
    %58 = arith.cmpi eq, %20, %57 : vector<1x24x1xi32>
    %cst_16 = arith.constant 0.407807201 : f32
    %59 = vector.broadcast %cst_16 : f32 to vector<6x1x16xf32>
    %60 = arith.mulf %59, %19 : vector<6x1x16xf32>
    %cst_17 = arith.constant 0.296096414 : f32
    %61 = vector.broadcast %cst_17 : f32 to vector<6x1x16xf32>
    %62 = arith.mulf %61, %18 : vector<6x1x16xf32>
    %63 = arith.addf %60, %62 : vector<6x1x16xf32>
    %cst_18 = arith.constant 0.000000e+00 : f32
    %64 = vector.shape_cast %58 : vector<1x24x1xi1> to vector<1x24x1xi1>
    %65 = vector.broadcast %64 : vector<1x24x1xi1> to vector<6x24x16xi1>
    %66 = vector.shape_cast %63 : vector<6x1x16xf32> to vector<6x1x16xf32>
    %67 = vector.broadcast %66 : vector<6x1x16xf32> to vector<6x24x16xf32>
    %68 = vector.broadcast %cst_18 : f32 to vector<6x24x16xf32>
    %69 = arith.select %65, %67, %68 : vector<6x24x16xi1>, vector<6x24x16xf32>
    %70 = arith.addf %56, %69 : vector<6x24x16xf32>
    %cst_19 = arith.constant 0.000000e+00 : f32
    %71 = vector.broadcast %cst_19 : f32 to vector<6x24x2xf32>
    %cst_20 = arith.constant 0.000000e+00 : f32
    %72 = vector.broadcast %cst_20 : f32 to vector<6x24x110xf32>
    %73 = tpu.concatenate %71, %70, %72 in 2 : vector<6x24x2xf32>, vector<6x24x16xf32>, vector<6x24x110xf32> -> vector<6x24x128xf32>
    %c1_i32_21 = arith.constant 1 : i32
    %74 = tpu.dynamic_rotate %73 by %c1_i32_21 dim 2 : vector<6x24x128xf32>, i32 -> vector<6x24x128xf32>
    %c127_i32 = arith.constant 127 : i32
    %75 = tpu.dynamic_rotate %73 by %c127_i32 dim 2 : vector<6x24x128xf32>, i32 -> vector<6x24x128xf32>
    %76 = arith.addf %74, %75 : vector<6x24x128xf32>
    %cst_22 = arith.constant 0.296096414 : f32
    %77 = vector.broadcast %cst_22 : f32 to vector<6x24x128xf32>
    %78 = arith.mulf %77, %76 : vector<6x24x128xf32>
    %cst_23 = arith.constant 0.407807201 : f32
    %79 = vector.broadcast %cst_23 : f32 to vector<6x24x128xf32>
    %80 = arith.mulf %79, %73 : vector<6x24x128xf32>
    %81 = arith.addf %78, %80 : vector<6x24x128xf32>
    %82 = vector.extract_strided_slice %70 {offsets = [0, 0, 1], sizes = [6, 24, 1], strides = [1, 1, 1]} : vector<6x24x16xf32> to vector<6x24x1xf32>
    %83 = vector.extract_strided_slice %70 {offsets = [0, 0, 2], sizes = [6, 24, 1], strides = [1, 1, 1]} : vector<6x24x16xf32> to vector<6x24x1xf32>
    %84 = vector.extract_strided_slice %70 {offsets = [0, 0, 14], sizes = [6, 24, 1], strides = [1, 1, 1]} : vector<6x24x16xf32> to vector<6x24x1xf32>
    %85 = vector.extract_strided_slice %70 {offsets = [0, 0, 13], sizes = [6, 24, 1], strides = [1, 1, 1]} : vector<6x24x16xf32> to vector<6x24x1xf32>
    %86 = tpu.iota {dimensions = array<i32: 2>} : vector<1x1x128xi32>
    %c1_i32_24 = arith.constant 1 : i32
    %87 = vector.broadcast %c1_i32_24 : i32 to vector<1x1x128xi32>
    %88 = arith.cmpi eq, %86, %87 : vector<1x1x128xi32>
    %cst_25 = arith.constant 0.296096414 : f32
    %89 = vector.broadcast %cst_25 : f32 to vector<6x24x1xf32>
    %90 = arith.mulf %89, %83 : vector<6x24x1xf32>
    %cst_26 = arith.constant 0.407807201 : f32
    %91 = vector.broadcast %cst_26 : f32 to vector<6x24x1xf32>
    %92 = arith.mulf %91, %82 : vector<6x24x1xf32>
    %93 = arith.addf %90, %92 : vector<6x24x1xf32>
    %cst_27 = arith.constant 0.000000e+00 : f32
    %94 = vector.shape_cast %88 : vector<1x1x128xi1> to vector<1x1x128xi1>
    %95 = vector.broadcast %94 : vector<1x1x128xi1> to vector<6x24x128xi1>
    %96 = vector.shape_cast %93 : vector<6x24x1xf32> to vector<6x24x1xf32>
    %97 = vector.broadcast %96 : vector<6x24x1xf32> to vector<6x24x128xf32>
    %98 = vector.broadcast %cst_27 : f32 to vector<6x24x128xf32>
    %99 = arith.select %95, %97, %98 : vector<6x24x128xi1>, vector<6x24x128xf32>
    %100 = arith.addf %81, %99 : vector<6x24x128xf32>
    %c2_i32_28 = arith.constant 2 : i32
    %101 = vector.broadcast %c2_i32_28 : i32 to vector<1x1x128xi32>
    %102 = arith.cmpi eq, %86, %101 : vector<1x1x128xi32>
    %cst_29 = arith.constant 0.296096414 : f32
    %103 = vector.broadcast %cst_29 : f32 to vector<6x24x1xf32>
    %104 = arith.mulf %103, %82 : vector<6x24x1xf32>
    %cst_30 = arith.constant 0.000000e+00 : f32
    %105 = vector.shape_cast %102 : vector<1x1x128xi1> to vector<1x1x128xi1>
    %106 = vector.broadcast %105 : vector<1x1x128xi1> to vector<6x24x128xi1>
    %107 = vector.shape_cast %104 : vector<6x24x1xf32> to vector<6x24x1xf32>
    %108 = vector.broadcast %107 : vector<6x24x1xf32> to vector<6x24x128xf32>
    %109 = vector.broadcast %cst_30 : f32 to vector<6x24x128xf32>
    %110 = arith.select %106, %108, %109 : vector<6x24x128xi1>, vector<6x24x128xf32>
    %111 = arith.addf %100, %110 : vector<6x24x128xf32>
    %c17_i32_31 = arith.constant 17 : i32
    %112 = vector.broadcast %c17_i32_31 : i32 to vector<1x1x128xi32>
    %113 = arith.cmpi eq, %86, %112 : vector<1x1x128xi32>
    %cst_32 = arith.constant 0.296096414 : f32
    %114 = vector.broadcast %cst_32 : f32 to vector<6x24x1xf32>
    %115 = arith.mulf %114, %84 : vector<6x24x1xf32>
    %cst_33 = arith.constant 0.000000e+00 : f32
    %116 = vector.shape_cast %113 : vector<1x1x128xi1> to vector<1x1x128xi1>
    %117 = vector.broadcast %116 : vector<1x1x128xi1> to vector<6x24x128xi1>
    %118 = vector.shape_cast %115 : vector<6x24x1xf32> to vector<6x24x1xf32>
    %119 = vector.broadcast %118 : vector<6x24x1xf32> to vector<6x24x128xf32>
    %120 = vector.broadcast %cst_33 : f32 to vector<6x24x128xf32>
    %121 = arith.select %117, %119, %120 : vector<6x24x128xi1>, vector<6x24x128xf32>
    %122 = arith.addf %111, %121 : vector<6x24x128xf32>
    %c18_i32_34 = arith.constant 18 : i32
    %123 = vector.broadcast %c18_i32_34 : i32 to vector<1x1x128xi32>
    %124 = arith.cmpi eq, %86, %123 : vector<1x1x128xi32>
    %cst_35 = arith.constant 0.407807201 : f32
    %125 = vector.broadcast %cst_35 : f32 to vector<6x24x1xf32>
    %126 = arith.mulf %125, %84 : vector<6x24x1xf32>
    %cst_36 = arith.constant 0.296096414 : f32
    %127 = vector.broadcast %cst_36 : f32 to vector<6x24x1xf32>
    %128 = arith.mulf %127, %85 : vector<6x24x1xf32>
    %129 = arith.addf %126, %128 : vector<6x24x1xf32>
    %cst_37 = arith.constant 0.000000e+00 : f32
    %130 = vector.shape_cast %124 : vector<1x1x128xi1> to vector<1x1x128xi1>
    %131 = vector.broadcast %130 : vector<1x1x128xi1> to vector<6x24x128xi1>
    %132 = vector.shape_cast %129 : vector<6x24x1xf32> to vector<6x24x1xf32>
    %133 = vector.broadcast %132 : vector<6x24x1xf32> to vector<6x24x128xf32>
    %134 = vector.broadcast %cst_37 : f32 to vector<6x24x128xf32>
    %135 = arith.select %131, %133, %134 : vector<6x24x128xi1>, vector<6x24x128xf32>
    %136 = arith.addf %122, %135 : vector<6x24x128xf32>
    %c0_38 = arith.constant 0 : index
    %c0_39 = arith.constant 0 : index
    %c0_40 = arith.constant 0 : index
    %137 = vector.load %arg2[%c0_38, %c0_39, %c0_40] : memref<6x24x128xf32, #tpu.memory_space<vmem>>, vector<6x24x128xf32>
    tpu.vector_store %arg2[%c0_38, %c0_39, %c0_40], %136 {strides = array<i32>} : memref<6x24x128xf32, #tpu.memory_space<vmem>>, vector<6x24x128xf32>,
    return
  }
  func.func @transform_0(%arg0: i32) -> (i32, i32, i32) {
    %c0_i32 = arith.constant 0 : i32
    %c0_i32_0 = arith.constant 0 : i32
    %c0_i32_1 = arith.constant 0 : i32
    return %arg0, %c0_i32, %c0_i32_0 : i32, i32, i32
  }
  func.func @transform_1(%arg0: i32) -> (i32, i32, i32) {
    %c0_i32 = arith.constant 0 : i32
    %c0_i32_0 = arith.constant 0 : i32
    %c0_i32_1 = arith.constant 0 : i32
    return %arg0, %c0_i32, %c0_i32_0 : i32, i32, i32
  }
}

</mosaic_0001>

<llo_original>
// kernel: tpu_custom_call.1
$region0: #{tpu_custom_call.1}
  #allocation0 [shape = 'u32[]', space=smem, size = 0x4, offset = 0x4, fixed_abs, tag = 'smem constant byte address 0x4 - core index']
  #allocation1 [shape = 'u32[72,128]{1,0:T(1,128)}', space=vmem, size = 0x9000, scoped, tag = 'internal scratch']
  %s0 = inlined_call_operand.hbm [shape: f32[6,16,16], index: 0, kind: input, shape index: {}]
  %s1 = inlined_call_operand.hbm [shape: f32[6,24,128], index: 1, kind: output, shape index: {}]
  %s2 = sld [smem:[#allocation0]]
  $region18: #{tpu_custom_call.1} parent=0
    _
  %s4 = ssub.s32 1, %s2
  %s5 = scalar_select 0, %s4, %s2
  $region1: #{tpu_custom_call.1} parent=0
    #allocation2 [shape = 'u8[49152]{0}', space=vmem, size = 0xc000, scoped, tag = 'input window, operand 0, single buffered']
    #allocation3 [shape = 's32[1]{0}', space=sflag, size = 0x4, scoped, tag = 'scoped memory for tpu_custom_call.1']
    #allocation4 [shape = 's32[1]{0}', space=sflag, size = 0x4, scoped, tag = 'scoped memory for tpu_custom_call.1']
    #allocation5 [shape = 'u8[73728]{0}', space=vmem, size = 0x12000, scoped, tag = 'output window, operand 0, single buffered']
    %6 = vsyncpa [#allocation3], 0
    %7 = vsyncpa [#allocation4], 0
    // Predicated region
    $region2: #{tpu_custom_call.1} parent=1 // pred_check
      _
    $region3: #{tpu_custom_call.1} parent=1 // pred_check_branch
      %9 = sbr.rel (0) target = $region5
    $region4: #{tpu_custom_call.1} parent=1 // pred_region
      %11 = vsyncadd [#allocation3], 0
      %s12 = sshll.u32 %s0, 4
      %s13 = int_to_ptr.hbm [resolvable:$true] %s12
      %s14 = sshll.u32 [#allocation2], 4
      %s15 = int_to_ptr.vmem [resolvable:$true] %s14
      %20 = dma.hbm_to_vmem [thread:$0]  %s13, 1536, %s15, [#allocation3], 128, 128, 8
    $region5: #{tpu_custom_call.1} parent=1 // pred_fallthru
      _
    // Predicated region
    $region6: #{tpu_custom_call.1} parent=1 // pred_check
      _
    $region7: #{tpu_custom_call.1} parent=1 // pred_check_branch
      %22 = sbr.rel (0) target = $region9
    $region8: #{tpu_custom_call.1} parent=1 // pred_region
      %24 = dma.done [#allocation3], 1536
    $region9: #{tpu_custom_call.1} parent=1 // pred_fallthru
      _
    %v25 = vld [vmem:[#allocation2] sm:$0xff]
    %v26 = vld [vmem:[#allocation2 + $0x8] sm:$0xff]
    %v27 = vld [vmem:[#allocation2 + $0x10] sm:$0xff]
    %v28 = vld [vmem:[#allocation2 + $0x18] sm:$0xff]
    %v29 = vld [vmem:[#allocation2 + $0x20] sm:$0xff]
    %v30 = vld [vmem:[#allocation2 + $0x28] sm:$0xff]
    %v31 = vld [vmem:[#allocation2 + $0x30] sm:$0xff]
    %v32 = vld [vmem:[#allocation2 + $0x38] sm:$0xff]
    %v33 = vld [vmem:[#allocation2 + $0x40] sm:$0xff]
    %v34 = vld [vmem:[#allocation2 + $0x48] sm:$0xff]
    %v35 = vld [vmem:[#allocation2 + $0x50] sm:$0xff]
    %v36 = vld [vmem:[#allocation2 + $0x58] sm:$0xff]
    %vm49 = vcmask 1040384
    %v50 = vrot.slane %v25, 7
    %v51 = vrot.slane %v26, 7
    %v52 = vsel %vm49, %v50, %v51
    %v53 = vrot.slane %v27, 7
    %v54 = vrot.slane %v28, 7
    %v55 = vsel %vm49, %v53, %v54
    %v56 = vrot.slane %v29, 7
    %v57 = vrot.slane %v30, 7
    %v58 = vsel %vm49, %v56, %v57
    %v59 = vrot.slane %v31, 7
    %v60 = vrot.slane %v32, 7
    %v61 = vsel %vm49, %v59, %v60
    %v62 = vrot.slane %v33, 7
    %v63 = vrot.slane %v34, 7
    %v64 = vsel %vm49, %v62, %v63
    %v65 = vrot.slane %v35, 7
    %v66 = vrot.slane %v36, 7
    %v67 = vsel %vm49, %v65, %v66
    %v86 = vsel %vm49, 0.0, %v50
    %v87 = vsel %vm49, 0.0, %v53
    %v88 = vsel %vm49, 0.0, %v56
    %v89 = vsel %vm49, 0.0, %v59
    %v90 = vsel %vm49, 0.0, %v62
    %v91 = vsel %vm49, 0.0, %v65
    %v92 = vsel %vm49, %v51, 0.0
    %v93 = vsel %vm49, %v54, 0.0
    %v94 = vsel %vm49, %v57, 0.0
    %v95 = vsel %vm49, %v60, 0.0
    %v96 = vsel %vm49, %v63, 0.0
    %v97 = vsel %vm49, %v66, 0.0
    %vm98 = vcmask 1041408
    %v99 = vrot.slane %v25, 6
    %v100 = vrot.slane %v26, 6
    %v101 = vsel %vm98, %v99, %v100
    %v102 = vrot.slane %v27, 6
    %v103 = vrot.slane %v28, 6
    %v104 = vsel %vm98, %v102, %v103
    %v105 = vrot.slane %v29, 6
    %v106 = vrot.slane %v30, 6
    %v107 = vsel %vm98, %v105, %v106
    %v108 = vrot.slane %v31, 6
    %v109 = vrot.slane %v32, 6
    %v110 = vsel %vm98, %v108, %v109
    %v111 = vrot.slane %v33, 6
    %v112 = vrot.slane %v34, 6
    %v113 = vsel %vm98, %v111, %v112
    %v114 = vrot.slane %v35, 6
    %v115 = vrot.slane %v36, 6
    %v116 = vsel %vm98, %v114, %v115
    %v135 = vsel %vm98, 0.0, %v99
    %v136 = vsel %vm98, 0.0, %v102
    %v137 = vsel %vm98, 0.0, %v105
    %v138 = vsel %vm98, 0.0, %v108
    %v139 = vsel %vm98, 0.0, %v111
    %v140 = vsel %vm98, 0.0, %v114
    %v141 = vsel %vm98, %v100, 0.0
    %v142 = vsel %vm98, %v103, 0.0
    %v143 = vsel %vm98, %v106, 0.0
    %v144 = vsel %vm98, %v109, 0.0
    %v145 = vsel %vm98, %v112, 0.0
    %v146 = vsel %vm98, %v115, 0.0
    %vm147 = vcmask 1042432
    %v148 = vrot.slane %v25, 5
    %v149 = vrot.slane %v26, 5
    %v150 = vsel %vm147, %v148, %v149
    %v151 = vrot.slane %v27, 5
    %v152 = vrot.slane %v28, 5
    %v153 = vsel %vm147, %v151, %v152
    %v154 = vrot.slane %v29, 5
    %v155 = vrot.slane %v30, 5
    %v156 = vsel %vm147, %v154, %v155
    %v157 = vrot.slane %v31, 5
    %v158 = vrot.slane %v32, 5
    %v159 = vsel %vm147, %v157, %v158
    %v160 = vrot.slane %v33, 5
    %v161 = vrot.slane %v34, 5
    %v162 = vsel %vm147, %v160, %v161
    %v163 = vrot.slane %v35, 5
    %v164 = vrot.slane %v36, 5
    %v165 = vsel %vm147, %v163, %v164
    %v184 = vsel %vm147, 0.0, %v148
    %v185 = vsel %vm147, 0.0, %v151
    %v186 = vsel %vm147, 0.0, %v154
    %v187 = vsel %vm147, 0.0, %v157
    %v188 = vsel %vm147, 0.0, %v160
    %v189 = vsel %vm147, 0.0, %v163
    %v190 = vsel %vm147, %v149, 0.0
    %v191 = vsel %vm147, %v152, 0.0
    %v192 = vsel %vm147, %v155, 0.0
    %v193 = vsel %vm147, %v158, 0.0
    %v194 = vsel %vm147, %v161, 0.0
    %v195 = vsel %vm147, %v164, 0.0
    %v196 = vadd.f32 %v86, %v184
    %v197 = vadd.f32 %v52, %v150
    %v198 = vadd.f32 %v92, %v190
    %v199 = vadd.f32 %v87, %v185
    %v200 = vadd.f32 %v55, %v153
    %v201 = vadd.f32 %v93, %v191
    %v202 = vadd.f32 %v88, %v186
    %v203 = vadd.f32 %v58, %v156
    %v204 = vadd.f32 %v94, %v192
    %v205 = vadd.f32 %v89, %v187
    %v206 = vadd.f32 %v61, %v159
    %v207 = vadd.f32 %v95, %v193
    %v208 = vadd.f32 %v90, %v188
    %v209 = vadd.f32 %v64, %v162
    %v210 = vadd.f32 %v96, %v194
    %v211 = vadd.f32 %v91, %v189
    %v212 = vadd.f32 %v67, %v165
    %v213 = vadd.f32 %v97, %v195
    %v214 = vmul.f32 %v196, 0.2960964
    %v215 = vmul.f32 %v197, 0.2960964
    %v216 = vmul.f32 %v198, 0.2960964
    %v217 = vmul.f32 %v199, 0.2960964
    %v218 = vmul.f32 %v200, 0.2960964
    %v219 = vmul.f32 %v201, 0.2960964
    %v220 = vmul.f32 %v202, 0.2960964
    %v221 = vmul.f32 %v203, 0.2960964
    %v222 = vmul.f32 %v204, 0.2960964
    %v223 = vmul.f32 %v205, 0.2960964
    %v224 = vmul.f32 %v206, 0.2960964
    %v225 = vmul.f32 %v207, 0.2960964
    %v226 = vmul.f32 %v208, 0.2960964
    %v227 = vmul.f32 %v209, 0.2960964
    %v228 = vmul.f32 %v210, 0.2960964
    %v229 = vmul.f32 %v211, 0.2960964
    %v230 = vmul.f32 %v212, 0.2960964
    %v231 = vmul.f32 %v213, 0.2960964
    %v232 = vmul.f32 %v135, 0.4078072
    %v233 = vmul.f32 %v101, 0.4078072
    %v234 = vmul.f32 %v141, 0.4078072
    %v235 = vmul.f32 %v136, 0.4078072
    %v236 = vmul.f32 %v104, 0.4078072
    %v237 = vmul.f32 %v142, 0.4078072
    %v238 = vmul.f32 %v137, 0.4078072
    %v239 = vmul.f32 %v107, 0.4078072
    %v240 = vmul.f32 %v143, 0.4078072
    %v241 = vmul.f32 %v138, 0.4078072
    %v242 = vmul.f32 %v110, 0.4078072
    %v243 = vmul.f32 %v144, 0.4078072
    %v244 = vmul.f32 %v139, 0.4078072
    %v245 = vmul.f32 %v113, 0.4078072
    %v246 = vmul.f32 %v145, 0.4078072
    %v247 = vmul.f32 %v140, 0.4078072
    %v248 = vmul.f32 %v116, 0.4078072
    %v249 = vmul.f32 %v146, 0.4078072
    %v250 = vadd.f32 %v214, %v232
    %v251 = vadd.f32 %v215, %v233
    %v252 = vadd.f32 %v216, %v234
    %v253 = vadd.f32 %v217, %v235
    %v254 = vadd.f32 %v218, %v236
    %v255 = vadd.f32 %v219, %v237
    %v256 = vadd.f32 %v220, %v238
    %v257 = vadd.f32 %v221, %v239
    %v258 = vadd.f32 %v222, %v240
    %v259 = vadd.f32 %v223, %v241
    %v260 = vadd.f32 %v224, %v242
    %v261 = vadd.f32 %v225, %v243
    %v262 = vadd.f32 %v226, %v244
    %v263 = vadd.f32 %v227, %v245
    %v264 = vadd.f32 %v228, %v246
    %v265 = vadd.f32 %v229, %v247
    %v266 = vadd.f32 %v230, %v248
    %v267 = vadd.f32 %v231, %v249
    %v268 = vlaneseq
    %v269 = vshrl.u32 %v268, 7
    %v270 = vadd.s32 %v269, 8
    %v271 = vadd.s32 %v269, 16
    %vm272 = vcmp.eq.s32.totalorder %v269, 1
    %vm273 = vcmp.eq.s32.totalorder %v270, 1
    %vm274 = vcmp.eq.s32.totalorder %v271, 1
    %v275 = vmul.f32 %v25, 0.2960964
    %v276 = vmul.f32 %v27, 0.2960964
    %v277 = vmul.f32 %v29, 0.2960964
    %v278 = vmul.f32 %v31, 0.2960964
    %v279 = vmul.f32 %v33, 0.2960964
    %v280 = vmul.f32 %v35, 0.2960964
    %v281 = vmul.f32 %v25, 0.4078072
    %v282 = vmul.f32 %v27, 0.4078072
    %v283 = vmul.f32 %v29, 0.4078072
    %v284 = vmul.f32 %v31, 0.4078072
    %v285 = vmul.f32 %v33, 0.4078072
    %v286 = vmul.f32 %v35, 0.4078072
    %v293 = vrot.slane %v281, 7
    %v294 = vrot.slane %v282, 7
    %v295 = vrot.slane %v283, 7
    %v296 = vrot.slane %v284, 7
    %v297 = vrot.slane %v285, 7
    %v298 = vrot.slane %v286, 7
    %v305 = vadd.f32 %v275, %v293
    %v306 = vadd.f32 %v276, %v294
    %v307 = vadd.f32 %v277, %v295
    %v308 = vadd.f32 %v278, %v296
    %v309 = vadd.f32 %v279, %v297
    %v310 = vadd.f32 %v280, %v298
    %v311 = vsel %vm272, 1, 0
    %v312 = vsel %vm273, 1, 0
    %v313 = vsel %vm274, 1, 0
    %vm314 = vcmp.eq.s32.totalorder %v311, 1
    %vm315 = vcmp.eq.s32.totalorder %v312, 1
    %vm316 = vcmp.eq.s32.totalorder %v313, 1
    %v317 = vperm.slane %v305, 2
    %v318 = vperm.slane %v306, 2
    %v319 = vperm.slane %v307, 2
    %v320 = vperm.slane %v308, 2
    %v321 = vperm.slane %v309, 2
    %v322 = vperm.slane %v310, 2
    %v323 = vsel %vm314, %v317, 0.0
    %v324 = vsel %vm315, %v317, 0.0
    %v325 = vsel %vm316, %v317, 0.0
    %v326 = vsel %vm314, %v318, 0.0
    %v327 = vsel %vm315, %v318, 0.0
    %v328 = vsel %vm316, %v318, 0.0
    %v329 = vsel %vm314, %v319, 0.0
    %v330 = vsel %vm315, %v319, 0.0
    %v331 = vsel %vm316, %v319, 0.0
    %v332 = vsel %vm314, %v320, 0.0
    %v333 = vsel %vm315, %v320, 0.0
    %v334 = vsel %vm316, %v320, 0.0
    %v335 = vsel %vm314, %v321, 0.0
    %v336 = vsel %vm315, %v321, 0.0
    %v337 = vsel %vm316, %v321, 0.0
    %v338 = vsel %vm314, %v322, 0.0
    %v339 = vsel %vm315, %v322, 0.0
    %v340 = vsel %vm316, %v322, 0.0
    %v341 = vadd.f32 %v250, %v323
    %v342 = vadd.f32 %v251, %v324
    %v343 = vadd.f32 %v252, %v325
    %v344 = vadd.f32 %v253, %v326
    %v345 = vadd.f32 %v254, %v327
    %v346 = vadd.f32 %v255, %v328
    %v347 = vadd.f32 %v256, %v329
    %v348 = vadd.f32 %v257, %v330
    %v349 = vadd.f32 %v258, %v331
    %v350 = vadd.f32 %v259, %v332
    %v351 = vadd.f32 %v260, %v333
    %v352 = vadd.f32 %v261, %v334
    %v353 = vadd.f32 %v262, %v335
    %v354 = vadd.f32 %v263, %v336
    %v355 = vadd.f32 %v264, %v337
    %v356 = vadd.f32 %v265, %v338
    %v357 = vadd.f32 %v266, %v339
    %v358 = vadd.f32 %v267, %v340
    %vm359 = vcmp.eq.s32.totalorder %v269, 2
    %vm360 = vcmp.eq.s32.totalorder %v270, 2
    %vm361 = vcmp.eq.s32.totalorder %v271, 2
    %v362 = vsel %vm359, 1, 0
    %v363 = vsel %vm360, 1, 0
    %v364 = vsel %vm361, 1, 0
    %vm365 = vcmp.eq.s32.totalorder %v362, 1
    %vm366 = vcmp.eq.s32.totalorder %v363, 1
    %vm367 = vcmp.eq.s32.totalorder %v364, 1
    %v368 = vperm.slane %v275, 1
    %v369 = vperm.slane %v276, 1
    %v370 = vperm.slane %v277, 1
    %v371 = vperm.slane %v278, 1
    %v372 = vperm.slane %v279, 1
    %v373 = vperm.slane %v280, 1
    %v374 = vsel %vm365, %v368, 0.0
    %v375 = vsel %vm366, %v368, 0.0
    %v376 = vsel %vm367, %v368, 0.0
    %v377 = vsel %vm365, %v369, 0.0
    %v378 = vsel %vm366, %v369, 0.0
    %v379 = vsel %vm367, %v369, 0.0
    %v380 = vsel %vm365, %v370, 0.0
    %v381 = vsel %vm366, %v370, 0.0
    %v382 = vsel %vm367, %v370, 0.0
    %v383 = vsel %vm365, %v371, 0.0
    %v384 = vsel %vm366, %v371, 0.0
    %v385 = vsel %vm367, %v371, 0.0
    %v386 = vsel %vm365, %v372, 0.0
    %v387 = vsel %vm366, %v372, 0.0
    %v388 = vsel %vm367, %v372, 0.0
    %v389 = vsel %vm365, %v373, 0.0
    %v390 = vsel %vm366, %v373, 0.0
    %v391 = vsel %vm367, %v373, 0.0
    %v392 = vadd.f32 %v341, %v374
    %v393 = vadd.f32 %v342, %v375
    %v394 = vadd.f32 %v343, %v376
    %v395 = vadd.f32 %v344, %v377
    %v396 = vadd.f32 %v345, %v378
    %v397 = vadd.f32 %v346, %v379
    %v398 = vadd.f32 %v347, %v380
    %v399 = vadd.f32 %v348, %v381
    %v400 = vadd.f32 %v349, %v382
    %v401 = vadd.f32 %v350, %v383
    %v402 = vadd.f32 %v351, %v384
    %v403 = vadd.f32 %v352, %v385
    %v404 = vadd.f32 %v353, %v386
    %v405 = vadd.f32 %v354, %v387
    %v406 = vadd.f32 %v355, %v388
    %v407 = vadd.f32 %v356, %v389
    %v408 = vadd.f32 %v357, %v390
    %v409 = vadd.f32 %v358, %v391
    %vm410 = vcmp.eq.s32.totalorder %v269, 17
    %vm411 = vcmp.eq.s32.totalorder %v270, 17
    %vm412 = vcmp.eq.s32.totalorder %v271, 17
    %v413 = vmul.f32 %v26, 0.2960964
    %v414 = vmul.f32 %v28, 0.2960964
    %v415 = vmul.f32 %v30, 0.2960964
    %v416 = vmul.f32 %v32, 0.2960964
    %v417 = vmul.f32 %v34, 0.2960964
    %v418 = vmul.f32 %v36, 0.2960964
    %v419 = vsel %vm410, 1, 0
    %v420 = vsel %vm411, 1, 0
    %v421 = vsel %vm412, 1, 0
    %vm422 = vcmp.eq.s32.totalorder %v419, 1
    %vm423 = vcmp.eq.s32.totalorder %v420, 1
    %vm424 = vcmp.eq.s32.totalorder %v421, 1
    %v425 = vperm.slane %v413, 6
    %v426 = vperm.slane %v414, 6
    %v427 = vperm.slane %v415, 6
    %v428 = vperm.slane %v416, 6
    %v429 = vperm.slane %v417, 6
    %v430 = vperm.slane %v418, 6
    %v431 = vsel %vm422, %v425, 0.0
    %v432 = vsel %vm423, %v425, 0.0
    %v433 = vsel %vm424, %v425, 0.0
    %v434 = vsel %vm422, %v426, 0.0
    %v435 = vsel %vm423, %v426, 0.0
    %v436 = vsel %vm424, %v426, 0.0
    %v437 = vsel %vm422, %v427, 0.0
    %v438 = vsel %vm423, %v427, 0.0
    %v439 = vsel %vm424, %v427, 0.0
    %v440 = vsel %vm422, %v428, 0.0
    %v441 = vsel %vm423, %v428, 0.0
    %v442 = vsel %vm424, %v428, 0.0
    %v443 = vsel %vm422, %v429, 0.0
    %v444 = vsel %vm423, %v429, 0.0
    %v445 = vsel %vm424, %v429, 0.0
    %v446 = vsel %vm422, %v430, 0.0
    %v447 = vsel %vm423, %v430, 0.0
    %v448 = vsel %vm424, %v430, 0.0
    %v449 = vadd.f32 %v392, %v431
    %v450 = vadd.f32 %v393, %v432
    %v451 = vadd.f32 %v394, %v433
    %v452 = vadd.f32 %v395, %v434
    %v453 = vadd.f32 %v396, %v435
    %v454 = vadd.f32 %v397, %v436
    %v455 = vadd.f32 %v398, %v437
    %v456 = vadd.f32 %v399, %v438
    %v457 = vadd.f32 %v400, %v439
    %v458 = vadd.f32 %v401, %v440
    %v459 = vadd.f32 %v402, %v441
    %v460 = vadd.f32 %v403, %v442
    %v461 = vadd.f32 %v404, %v443
    %v462 = vadd.f32 %v405, %v444
    %v463 = vadd.f32 %v406, %v445
    %v464 = vadd.f32 %v407, %v446
    %v465 = vadd.f32 %v408, %v447
    %v466 = vadd.f32 %v409, %v448
    %vm467 = vcmp.eq.s32.totalorder %v269, 18
    %vm468 = vcmp.eq.s32.totalorder %v270, 18
    %vm469 = vcmp.eq.s32.totalorder %v271, 18
    %v470 = vmul.f32 %v26, 0.4078072
    %v471 = vmul.f32 %v28, 0.4078072
    %v472 = vmul.f32 %v30, 0.4078072
    %v473 = vmul.f32 %v32, 0.4078072
    %v474 = vmul.f32 %v34, 0.4078072
    %v475 = vmul.f32 %v36, 0.4078072
    %v482 = vrot.slane %v413, 7
    %v483 = vrot.slane %v414, 7
    %v484 = vrot.slane %v415, 7
    %v485 = vrot.slane %v416, 7
    %v486 = vrot.slane %v417, 7
    %v487 = vrot.slane %v418, 7
    %v494 = vadd.f32 %v470, %v482
    %v495 = vadd.f32 %v471, %v483
    %v496 = vadd.f32 %v472, %v484
    %v497 = vadd.f32 %v473, %v485
    %v498 = vadd.f32 %v474, %v486
    %v499 = vadd.f32 %v475, %v487
    %v500 = vsel %vm467, 1, 0
    %v501 = vsel %vm468, 1, 0
    %v502 = vsel %vm469, 1, 0
    %vm503 = vcmp.eq.s32.totalorder %v500, 1
    %vm504 = vcmp.eq.s32.totalorder %v501, 1
    %vm505 = vcmp.eq.s32.totalorder %v502, 1
    %v506 = vperm.slane %v494, 6
    %v507 = vperm.slane %v495, 6
    %v508 = vperm.slane %v496, 6
    %v509 = vperm.slane %v497, 6
    %v510 = vperm.slane %v498, 6
    %v511 = vperm.slane %v499, 6
    %v512 = vsel %vm503, %v506, 0.0
    %v513 = vsel %vm504, %v506, 0.0
    %v514 = vsel %vm505, %v506, 0.0
    %v515 = vsel %vm503, %v507, 0.0
    %v516 = vsel %vm504, %v507, 0.0
    %v517 = vsel %vm505, %v507, 0.0
    %v518 = vsel %vm503, %v508, 0.0
    %v519 = vsel %vm504, %v508, 0.0
    %v520 = vsel %vm505, %v508, 0.0
    %v521 = vsel %vm503, %v509, 0.0
    %v522 = vsel %vm504, %v509, 0.0
    %v523 = vsel %vm505, %v509, 0.0
    %v524 = vsel %vm503, %v510, 0.0
    %v525 = vsel %vm504, %v510, 0.0
    %v526 = vsel %vm505, %v510, 0.0
    %v527 = vsel %vm503, %v511, 0.0
    %v528 = vsel %vm504, %v511, 0.0
    %v529 = vsel %vm505, %v511, 0.0
    %v530 = vadd.f32 %v449, %v512
    %v531 = vadd.f32 %v450, %v513
    %v532 = vadd.f32 %v451, %v514
    %v533 = vadd.f32 %v452, %v515
    %v534 = vadd.f32 %v453, %v516
    %v535 = vadd.f32 %v454, %v517
    %v536 = vadd.f32 %v455, %v518
    %v537 = vadd.f32 %v456, %v519
    %v538 = vadd.f32 %v457, %v520
    %v539 = vadd.f32 %v458, %v521
    %v540 = vadd.f32 %v459, %v522
    %v541 = vadd.f32 %v460, %v523
    %v542 = vadd.f32 %v461, %v524
    %v543 = vadd.f32 %v462, %v525
    %v544 = vadd.f32 %v463, %v526
    %v545 = vadd.f32 %v464, %v527
    %v546 = vadd.f32 %v465, %v528
    %v547 = vadd.f32 %v466, %v529
    %566 = vrot.lane.b32.xlu0 %v530, 2
    %v567 = vpop.permute.xlu0 %566
    %568 = vrot.lane.b32.xlu0 %v531, 2
    %v569 = vpop.permute.xlu0 %568
    %570 = vrot.lane.b32.xlu0 %v532, 2
    %v571 = vpop.permute.xlu0 %570
    %572 = vrot.lane.b32.xlu0 %v533, 2
    %v573 = vpop.permute.xlu0 %572
    %574 = vrot.lane.b32.xlu0 %v534, 2
    %v575 = vpop.permute.xlu0 %574
    %576 = vrot.lane.b32.xlu0 %v535, 2
    %v577 = vpop.permute.xlu0 %576
    %578 = vrot.lane.b32.xlu0 %v536, 2
    %v579 = vpop.permute.xlu0 %578
    %580 = vrot.lane.b32.xlu0 %v537, 2
    %v581 = vpop.permute.xlu0 %580
    %582 = vrot.lane.b32.xlu0 %v538, 2
    %v583 = vpop.permute.xlu0 %582
    %584 = vrot.lane.b32.xlu0 %v539, 2
    %v585 = vpop.permute.xlu0 %584
    %586 = vrot.lane.b32.xlu0 %v540, 2
    %v587 = vpop.permute.xlu0 %586
    %588 = vrot.lane.b32.xlu0 %v541, 2
    %v589 = vpop.permute.xlu0 %588
    %590 = vrot.lane.b32.xlu0 %v542, 2
    %v591 = vpop.permute.xlu0 %590
    %592 = vrot.lane.b32.xlu0 %v543, 2
    %v593 = vpop.permute.xlu0 %592
    %594 = vrot.lane.b32.xlu0 %v544, 2
    %v595 = vpop.permute.xlu0 %594
    %596 = vrot.lane.b32.xlu0 %v545, 2
    %v597 = vpop.permute.xlu0 %596
    %598 = vrot.lane.b32.xlu0 %v546, 2
    %v599 = vpop.permute.xlu0 %598
    %600 = vrot.lane.b32.xlu0 %v547, 2
    %v601 = vpop.permute.xlu0 %600
    %vm620 = vcmask 15360
    %v621 = vsel %vm620, 0.0, %v567
    %v622 = vsel %vm620, 0.0, %v569
    %v623 = vsel %vm620, 0.0, %v571
    %v624 = vsel %vm620, 0.0, %v573
    %v625 = vsel %vm620, 0.0, %v575
    %v626 = vsel %vm620, 0.0, %v577
    %v627 = vsel %vm620, 0.0, %v579
    %v628 = vsel %vm620, 0.0, %v581
    %v629 = vsel %vm620, 0.0, %v583
    %v630 = vsel %vm620, 0.0, %v585
    %v631 = vsel %vm620, 0.0, %v587
    %v632 = vsel %vm620, 0.0, %v589
    %v633 = vsel %vm620, 0.0, %v591
    %v634 = vsel %vm620, 0.0, %v593
    %v635 = vsel %vm620, 0.0, %v595
    %v636 = vsel %vm620, 0.0, %v597
    %v637 = vsel %vm620, 0.0, %v599
    %v638 = vsel %vm620, 0.0, %v601
    %vm639 = vcmask 146432
    %v640 = vsel %vm639, %v621, 0.0
    %v641 = vsel %vm639, %v622, 0.0
    %v642 = vsel %vm639, %v623, 0.0
    %v643 = vsel %vm639, %v624, 0.0
    %v644 = vsel %vm639, %v625, 0.0
    %v645 = vsel %vm639, %v626, 0.0
    %v646 = vsel %vm639, %v627, 0.0
    %v647 = vsel %vm639, %v628, 0.0
    %v648 = vsel %vm639, %v629, 0.0
    %v649 = vsel %vm639, %v630, 0.0
    %v650 = vsel %vm639, %v631, 0.0
    %v651 = vsel %vm639, %v632, 0.0
    %v652 = vsel %vm639, %v633, 0.0
    %v653 = vsel %vm639, %v634, 0.0
    %v654 = vsel %vm639, %v635, 0.0
    %v655 = vsel %vm639, %v636, 0.0
    %v656 = vsel %vm639, %v637, 0.0
    %v657 = vsel %vm639, %v638, 0.0
    %658 = vrot.lane.b32.xlu0 %v640, 1
    %v659 = vpop.permute.xlu0 %658
    %660 = vrot.lane.b32.xlu0 %v641, 1
    %v661 = vpop.permute.xlu0 %660
    %662 = vrot.lane.b32.xlu0 %v642, 1
    %v663 = vpop.permute.xlu0 %662
    %664 = vrot.lane.b32.xlu0 %v643, 1
    %v665 = vpop.permute.xlu0 %664
    %666 = vrot.lane.b32.xlu0 %v644, 1
    %v667 = vpop.permute.xlu0 %666
    %668 = vrot.lane.b32.xlu0 %v645, 1
    %v669 = vpop.permute.xlu0 %668
    %670 = vrot.lane.b32.xlu0 %v646, 1
    %v671 = vpop.permute.xlu0 %670
    %672 = vrot.lane.b32.xlu0 %v647, 1
    %v673 = vpop.permute.xlu0 %672
    %674 = vrot.lane.b32.xlu0 %v648, 1
    %v675 = vpop.permute.xlu0 %674
    %676 = vrot.lane.b32.xlu0 %v649, 1
    %v677 = vpop.permute.xlu0 %676
    %678 = vrot.lane.b32.xlu0 %v650, 1
    %v679 = vpop.permute.xlu0 %678
    %680 = vrot.lane.b32.xlu0 %v651, 1
    %v681 = vpop.permute.xlu0 %680
    %682 = vrot.lane.b32.xlu0 %v652, 1
    %v683 = vpop.permute.xlu0 %682
    %684 = vrot.lane.b32.xlu0 %v653, 1
    %v685 = vpop.permute.xlu0 %684
    %686 = vrot.lane.b32.xlu0 %v654, 1
    %v687 = vpop.permute.xlu0 %686
    %688 = vrot.lane.b32.xlu0 %v655, 1
    %v689 = vpop.permute.xlu0 %688
    %690 = vrot.lane.b32.xlu0 %v656, 1
    %v691 = vpop.permute.xlu0 %690
    %692 = vrot.lane.b32.xlu0 %v657, 1
    %v693 = vpop.permute.xlu0 %692
    %694 = vrot.lane.b32.xlu0 %v640, 127
    %v695 = vpop.permute.xlu0 %694
    %696 = vrot.lane.b32.xlu0 %v641, 127
    %v697 = vpop.permute.xlu0 %696
    %698 = vrot.lane.b32.xlu0 %v642, 127
    %v699 = vpop.permute.xlu0 %698
    %700 = vrot.lane.b32.xlu0 %v643, 127
    %v701 = vpop.permute.xlu0 %700
    %702 = vrot.lane.b32.xlu0 %v644, 127
    %v703 = vpop.permute.xlu0 %702
    %704 = vrot.lane.b32.xlu0 %v645, 127
    %v705 = vpop.permute.xlu0 %704
    %706 = vrot.lane.b32.xlu0 %v646, 127
    %v707 = vpop.permute.xlu0 %706
    %708 = vrot.lane.b32.xlu0 %v647, 127
    %v709 = vpop.permute.xlu0 %708
    %710 = vrot.lane.b32.xlu0 %v648, 127
    %v711 = vpop.permute.xlu0 %710
    %712 = vrot.lane.b32.xlu0 %v649, 127
    %v713 = vpop.permute.xlu0 %712
    %714 = vrot.lane.b32.xlu0 %v650, 127
    %v715 = vpop.permute.xlu0 %714
    %716 = vrot.lane.b32.xlu0 %v651, 127
    %v717 = vpop.permute.xlu0 %716
    %718 = vrot.lane.b32.xlu0 %v652, 127
    %v719 = vpop.permute.xlu0 %718
    %720 = vrot.lane.b32.xlu0 %v653, 127
    %v721 = vpop.permute.xlu0 %720
    %722 = vrot.lane.b32.xlu0 %v654, 127
    %v723 = vpop.permute.xlu0 %722
    %724 = vrot.lane.b32.xlu0 %v655, 127
    %v725 = vpop.permute.xlu0 %724
    %726 = vrot.lane.b32.xlu0 %v656, 127
    %v727 = vpop.permute.xlu0 %726
    %728 = vrot.lane.b32.xlu0 %v657, 127
    %v729 = vpop.permute.xlu0 %728
    %v730 = vadd.f32 %v659, %v695
    %v731 = vadd.f32 %v661, %v697
    %v732 = vadd.f32 %v663, %v699
    %v733 = vadd.f32 %v665, %v701
    %v734 = vadd.f32 %v667, %v703
    %v735 = vadd.f32 %v669, %v705
    %v736 = vadd.f32 %v671, %v707
    %v737 = vadd.f32 %v673, %v709
    %v738 = vadd.f32 %v675, %v711
    %v739 = vadd.f32 %v677, %v713
    %v740 = vadd.f32 %v679, %v715
    %v741 = vadd.f32 %v681, %v717
    %v742 = vadd.f32 %v683, %v719
    %v743 = vadd.f32 %v685, %v721
    %v744 = vadd.f32 %v687, %v723
    %v745 = vadd.f32 %v689, %v725
    %v746 = vadd.f32 %v691, %v727
    %v747 = vadd.f32 %v693, %v729
    %v748 = vmul.f32 %v730, 0.2960964
    %v749 = vmul.f32 %v731, 0.2960964
    %v750 = vmul.f32 %v732, 0.2960964
    %v751 = vmul.f32 %v733, 0.2960964
    %v752 = vmul.f32 %v734, 0.2960964
    %v753 = vmul.f32 %v735, 0.2960964
    %v754 = vmul.f32 %v736, 0.2960964
    %v755 = vmul.f32 %v737, 0.2960964
    %v756 = vmul.f32 %v738, 0.2960964
    %v757 = vmul.f32 %v739, 0.2960964
    %v758 = vmul.f32 %v740, 0.2960964
    %v759 = vmul.f32 %v741, 0.2960964
    %v760 = vmul.f32 %v742, 0.2960964
    %v761 = vmul.f32 %v743, 0.2960964
    %v762 = vmul.f32 %v744, 0.2960964
    %v763 = vmul.f32 %v745, 0.2960964
    %v764 = vmul.f32 %v746, 0.2960964
    %v765 = vmul.f32 %v747, 0.2960964
    %v766 = vmul.f32 %v640, 0.4078072
    %v767 = vmul.f32 %v641, 0.4078072
    %v768 = vmul.f32 %v642, 0.4078072
    %v769 = vmul.f32 %v643, 0.4078072
    %v770 = vmul.f32 %v644, 0.4078072
    %v771 = vmul.f32 %v645, 0.4078072
    %v772 = vmul.f32 %v646, 0.4078072
    %v773 = vmul.f32 %v647, 0.4078072
    %v774 = vmul.f32 %v648, 0.4078072
    %v775 = vmul.f32 %v649, 0.4078072
    %v776 = vmul.f32 %v650, 0.4078072
    %v777 = vmul.f32 %v651, 0.4078072
    %v778 = vmul.f32 %v652, 0.4078072
    %v779 = vmul.f32 %v653, 0.4078072
    %v780 = vmul.f32 %v654, 0.4078072
    %v781 = vmul.f32 %v655, 0.4078072
    %v782 = vmul.f32 %v656, 0.4078072
    %v783 = vmul.f32 %v657, 0.4078072
    %v784 = vadd.f32 %v748, %v766
    %v785 = vadd.f32 %v749, %v767
    %v786 = vadd.f32 %v750, %v768
    %v787 = vadd.f32 %v751, %v769
    %v788 = vadd.f32 %v752, %v770
    %v789 = vadd.f32 %v753, %v771
    %v790 = vadd.f32 %v754, %v772
    %v791 = vadd.f32 %v755, %v773
    %v792 = vadd.f32 %v756, %v774
    %v793 = vadd.f32 %v757, %v775
    %v794 = vadd.f32 %v758, %v776
    %v795 = vadd.f32 %v759, %v777
    %v796 = vadd.f32 %v760, %v778
    %v797 = vadd.f32 %v761, %v779
    %v798 = vadd.f32 %v762, %v780
    %v799 = vadd.f32 %v763, %v781
    %v800 = vadd.f32 %v764, %v782
    %v801 = vadd.f32 %v765, %v783
    %v802 = vlaneseq
    %v803 = vand.u32 %v802, 127
    %vm804 = vcmp.eq.s32.totalorder %v803, 1
    %v805 = vmul.f32 %v530, 0.2960964
    %v806 = vmul.f32 %v531, 0.2960964
    %v807 = vmul.f32 %v532, 0.2960964
    %v808 = vmul.f32 %v533, 0.2960964
    %v809 = vmul.f32 %v534, 0.2960964
    %v810 = vmul.f32 %v535, 0.2960964
    %v811 = vmul.f32 %v536, 0.2960964
    %v812 = vmul.f32 %v537, 0.2960964
    %v813 = vmul.f32 %v538, 0.2960964
    %v814 = vmul.f32 %v539, 0.2960964
    %v815 = vmul.f32 %v540, 0.2960964
    %v816 = vmul.f32 %v541, 0.2960964
    %v817 = vmul.f32 %v542, 0.2960964
    %v818 = vmul.f32 %v543, 0.2960964
    %v819 = vmul.f32 %v544, 0.2960964
    %v820 = vmul.f32 %v545, 0.2960964
    %v821 = vmul.f32 %v546, 0.2960964
    %v822 = vmul.f32 %v547, 0.2960964
    %v823 = vmul.f32 %v530, 0.4078072
    %v824 = vmul.f32 %v531, 0.4078072
    %v825 = vmul.f32 %v532, 0.4078072
    %v826 = vmul.f32 %v533, 0.4078072
    %v827 = vmul.f32 %v534, 0.4078072
    %v828 = vmul.f32 %v535, 0.4078072
    %v829 = vmul.f32 %v536, 0.4078072
    %v830 = vmul.f32 %v537, 0.4078072
    %v831 = vmul.f32 %v538, 0.4078072
    %v832 = vmul.f32 %v539, 0.4078072
    %v833 = vmul.f32 %v540, 0.4078072
    %v834 = vmul.f32 %v541, 0.4078072
    %v835 = vmul.f32 %v542, 0.4078072
    %v836 = vmul.f32 %v543, 0.4078072
    %v837 = vmul.f32 %v544, 0.4078072
    %v838 = vmul.f32 %v545, 0.4078072
    %v839 = vmul.f32 %v546, 0.4078072
    %v840 = vmul.f32 %v547, 0.4078072
    %859 = vrot.lane.b32.xlu0 %v823, 1
    %v860 = vpop.permute.xlu0 %859
    %861 = vrot.lane.b32.xlu0 %v824, 1
    %v862 = vpop.permute.xlu0 %861
    %863 = vrot.lane.b32.xlu0 %v825, 1
    %v864 = vpop.permute.xlu0 %863
    %865 = vrot.lane.b32.xlu0 %v826, 1
    %v866 = vpop.permute.xlu0 %865
    %867 = vrot.lane.b32.xlu0 %v827, 1
    %v868 = vpop.permute.xlu0 %867
    %869 = vrot.lane.b32.xlu0 %v828, 1
    %v870 = vpop.permute.xlu0 %869
    %871 = vrot.lane.b32.xlu0 %v829, 1
    %v872 = vpop.permute.xlu0 %871
    %873 = vrot.lane.b32.xlu0 %v830, 1
    %v874 = vpop.permute.xlu0 %873
    %875 = vrot.lane.b32.xlu0 %v831, 1
    %v876 = vpop.permute.xlu0 %875
    %877 = vrot.lane.b32.xlu0 %v832, 1
    %v878 = vpop.permute.xlu0 %877
    %879 = vrot.lane.b32.xlu0 %v833, 1
    %v880 = vpop.permute.xlu0 %879
    %881 = vrot.lane.b32.xlu0 %v834, 1
    %v882 = vpop.permute.xlu0 %881
    %883 = vrot.lane.b32.xlu0 %v835, 1
    %v884 = vpop.permute.xlu0 %883
    %885 = vrot.lane.b32.xlu0 %v836, 1
    %v886 = vpop.permute.xlu0 %885
    %887 = vrot.lane.b32.xlu0 %v837, 1
    %v888 = vpop.permute.xlu0 %887
    %889 = vrot.lane.b32.xlu0 %v838, 1
    %v890 = vpop.permute.xlu0 %889
    %891 = vrot.lane.b32.xlu0 %v839, 1
    %v892 = vpop.permute.xlu0 %891
    %893 = vrot.lane.b32.xlu0 %v840, 1
    %v894 = vpop.permute.xlu0 %893
    %v913 = vadd.f32 %v805, %v860
    %v914 = vadd.f32 %v806, %v862
    %v915 = vadd.f32 %v807, %v864
    %v916 = vadd.f32 %v808, %v866
    %v917 = vadd.f32 %v809, %v868
    %v918 = vadd.f32 %v810, %v870
    %v919 = vadd.f32 %v811, %v872
    %v920 = vadd.f32 %v812, %v874
    %v921 = vadd.f32 %v813, %v876
    %v922 = vadd.f32 %v814, %v878
    %v923 = vadd.f32 %v815, %v880
    %v924 = vadd.f32 %v816, %v882
    %v925 = vadd.f32 %v817, %v884
    %v926 = vadd.f32 %v818, %v886
    %v927 = vadd.f32 %v819, %v888
    %v928 = vadd.f32 %v820, %v890
    %v929 = vadd.f32 %v821, %v892
    %v930 = vadd.f32 %v822, %v894
    %v931 = vsel %vm804, 1, 0
    %vm932 = vcmp.eq.s32.totalorder %v931, 1
    %934 = vset.pattern.permute.xlu0 2
    %935 = vperm.xlu0 %934, %v913
    %v936 = vpop.permute.xlu0 %935
    %939 = vset.pattern.permute.xlu0 2
    %940 = vperm.xlu0 %939, %v914
    %v941 = vpop.permute.xlu0 %940
    %944 = vset.pattern.permute.xlu0 2
    %945 = vperm.xlu0 %944, %v915
    %v946 = vpop.permute.xlu0 %945
    %949 = vset.pattern.permute.xlu0 2
    %950 = vperm.xlu0 %949, %v916
    %v951 = vpop.permute.xlu0 %950
    %954 = vset.pattern.permute.xlu0 2
    %955 = vperm.xlu0 %954, %v917
    %v956 = vpop.permute.xlu0 %955
    %959 = vset.pattern.permute.xlu0 2
    %960 = vperm.xlu0 %959, %v918
    %v961 = vpop.permute.xlu0 %960
    %964 = vset.pattern.permute.xlu0 2
    %965 = vperm.xlu0 %964, %v919
    %v966 = vpop.permute.xlu0 %965
    %969 = vset.pattern.permute.xlu0 2
    %970 = vperm.xlu0 %969, %v920
    %v971 = vpop.permute.xlu0 %970
    %974 = vset.pattern.permute.xlu0 2
    %975 = vperm.xlu0 %974, %v921
    %v976 = vpop.permute.xlu0 %975
    %979 = vset.pattern.permute.xlu0 2
    %980 = vperm.xlu0 %979, %v922
    %v981 = vpop.permute.xlu0 %980
    %984 = vset.pattern.permute.xlu0 2
    %985 = vperm.xlu0 %984, %v923
    %v986 = vpop.permute.xlu0 %985
    %989 = vset.pattern.permute.xlu0 2
    %990 = vperm.xlu0 %989, %v924
    %v991 = vpop.permute.xlu0 %990
    %994 = vset.pattern.permute.xlu0 2
    %995 = vperm.xlu0 %994, %v925
    %v996 = vpop.permute.xlu0 %995
    %999 = vset.pattern.permute.xlu0 2
    %1000 = vperm.xlu0 %999, %v926
    %v1001 = vpop.permute.xlu0 %1000
    %1004 = vset.pattern.permute.xlu0 2
    %1005 = vperm.xlu0 %1004, %v927
    %v1006 = vpop.permute.xlu0 %1005
    %1009 = vset.pattern.permute.xlu0 2
    %1010 = vperm.xlu0 %1009, %v928
    %v1011 = vpop.permute.xlu0 %1010
    %1014 = vset.pattern.permute.xlu0 2
    %1015 = vperm.xlu0 %1014, %v929
    %v1016 = vpop.permute.xlu0 %1015
    %1019 = vset.pattern.permute.xlu0 2
    %1020 = vperm.xlu0 %1019, %v930
    %v1021 = vpop.permute.xlu0 %1020
    %v1023 = vsel %vm932, %v936, 0.0
    %v1024 = vsel %vm932, %v941, 0.0
    %v1025 = vsel %vm932, %v946, 0.0
    %v1026 = vsel %vm932, %v951, 0.0
    %v1027 = vsel %vm932, %v956, 0.0
    %v1028 = vsel %vm932, %v961, 0.0
    %v1029 = vsel %vm932, %v966, 0.0
    %v1030 = vsel %vm932, %v971, 0.0
    %v1031 = vsel %vm932, %v976, 0.0
    %v1032 = vsel %vm932, %v981, 0.0
    %v1033 = vsel %vm932, %v986, 0.0
    %v1034 = vsel %vm932, %v991, 0.0
    %v1035 = vsel %vm932, %v996, 0.0
    %v1036 = vsel %vm932, %v1001, 0.0
    %v1037 = vsel %vm932, %v1006, 0.0
    %v1038 = vsel %vm932, %v1011, 0.0
    %v1039 = vsel %vm932, %v1016, 0.0
    %v1040 = vsel %vm932, %v1021, 0.0
    %v1041 = vadd.f32 %v784, %v1023
    %v1042 = vadd.f32 %v785, %v1024
    %v1043 = vadd.f32 %v786, %v1025
    %v1044 = vadd.f32 %v787, %v1026
    %v1045 = vadd.f32 %v788, %v1027
    %v1046 = vadd.f32 %v789, %v1028
    %v1047 = vadd.f32 %v790, %v1029
    %v1048 = vadd.f32 %v791, %v1030
    %v1049 = vadd.f32 %v792, %v1031
    %v1050 = vadd.f32 %v793, %v1032
    %v1051 = vadd.f32 %v794, %v1033
    %v1052 = vadd.f32 %v795, %v1034
    %v1053 = vadd.f32 %v796, %v1035
    %v1054 = vadd.f32 %v797, %v1036
    %v1055 = vadd.f32 %v798, %v1037
    %v1056 = vadd.f32 %v799, %v1038
    %v1057 = vadd.f32 %v800, %v1039
    %v1058 = vadd.f32 %v801, %v1040
    %vm1059 = vcmp.eq.s32.totalorder %v803, 2
    %v1060 = vsel %vm1059, 1, 0
    %vm1061 = vcmp.eq.s32.totalorder %v1060, 1
    %1063 = vset.pattern.permute.xlu0 1
    %1064 = vperm.xlu0 %1063, %v805
    %v1065 = vpop.permute.xlu0 %1064
    %1068 = vset.pattern.permute.xlu0 1
    %1069 = vperm.xlu0 %1068, %v806
    %v1070 = vpop.permute.xlu0 %1069
    %1073 = vset.pattern.permute.xlu0 1
    %1074 = vperm.xlu0 %1073, %v807
    %v1075 = vpop.permute.xlu0 %1074
    %1078 = vset.pattern.permute.xlu0 1
    %1079 = vperm.xlu0 %1078, %v808
    %v1080 = vpop.permute.xlu0 %1079
    %1083 = vset.pattern.permute.xlu0 1
    %1084 = vperm.xlu0 %1083, %v809
    %v1085 = vpop.permute.xlu0 %1084
    %1088 = vset.pattern.permute.xlu0 1
    %1089 = vperm.xlu0 %1088, %v810
    %v1090 = vpop.permute.xlu0 %1089
    %1093 = vset.pattern.permute.xlu0 1
    %1094 = vperm.xlu0 %1093, %v811
    %v1095 = vpop.permute.xlu0 %1094
    %1098 = vset.pattern.permute.xlu0 1
    %1099 = vperm.xlu0 %1098, %v812
    %v1100 = vpop.permute.xlu0 %1099
    %1103 = vset.pattern.permute.xlu0 1
    %1104 = vperm.xlu0 %1103, %v813
    %v1105 = vpop.permute.xlu0 %1104
    %1108 = vset.pattern.permute.xlu0 1
    %1109 = vperm.xlu0 %1108, %v814
    %v1110 = vpop.permute.xlu0 %1109
    %1113 = vset.pattern.permute.xlu0 1
    %1114 = vperm.xlu0 %1113, %v815
    %v1115 = vpop.permute.xlu0 %1114
    %1118 = vset.pattern.permute.xlu0 1
    %1119 = vperm.xlu0 %1118, %v816
    %v1120 = vpop.permute.xlu0 %1119
    %1123 = vset.pattern.permute.xlu0 1
    %1124 = vperm.xlu0 %1123, %v817
    %v1125 = vpop.permute.xlu0 %1124
    %1128 = vset.pattern.permute.xlu0 1
    %1129 = vperm.xlu0 %1128, %v818
    %v1130 = vpop.permute.xlu0 %1129
    %1133 = vset.pattern.permute.xlu0 1
    %1134 = vperm.xlu0 %1133, %v819
    %v1135 = vpop.permute.xlu0 %1134
    %1138 = vset.pattern.permute.xlu0 1
    %1139 = vperm.xlu0 %1138, %v820
    %v1140 = vpop.permute.xlu0 %1139
    %1143 = vset.pattern.permute.xlu0 1
    %1144 = vperm.xlu0 %1143, %v821
    %v1145 = vpop.permute.xlu0 %1144
    %1148 = vset.pattern.permute.xlu0 1
    %1149 = vperm.xlu0 %1148, %v822
    %v1150 = vpop.permute.xlu0 %1149
    %v1152 = vsel %vm1061, %v1065, 0.0
    %v1153 = vsel %vm1061, %v1070, 0.0
    %v1154 = vsel %vm1061, %v1075, 0.0
    %v1155 = vsel %vm1061, %v1080, 0.0
    %v1156 = vsel %vm1061, %v1085, 0.0
    %v1157 = vsel %vm1061, %v1090, 0.0
    %v1158 = vsel %vm1061, %v1095, 0.0
    %v1159 = vsel %vm1061, %v1100, 0.0
    %v1160 = vsel %vm1061, %v1105, 0.0
    %v1161 = vsel %vm1061, %v1110, 0.0
    %v1162 = vsel %vm1061, %v1115, 0.0
    %v1163 = vsel %vm1061, %v1120, 0.0
    %v1164 = vsel %vm1061, %v1125, 0.0
    %v1165 = vsel %vm1061, %v1130, 0.0
    %v1166 = vsel %vm1061, %v1135, 0.0
    %v1167 = vsel %vm1061, %v1140, 0.0
    %v1168 = vsel %vm1061, %v1145, 0.0
    %v1169 = vsel %vm1061, %v1150, 0.0
    %v1170 = vadd.f32 %v1041, %v1152
    %v1171 = vadd.f32 %v1042, %v1153
    %v1172 = vadd.f32 %v1043, %v1154
    %v1173 = vadd.f32 %v1044, %v1155
    %v1174 = vadd.f32 %v1045, %v1156
    %v1175 = vadd.f32 %v1046, %v1157
    %v1176 = vadd.f32 %v1047, %v1158
    %v1177 = vadd.f32 %v1048, %v1159
    %v1178 = vadd.f32 %v1049, %v1160
    %v1179 = vadd.f32 %v1050, %v1161
    %v1180 = vadd.f32 %v1051, %v1162
    %v1181 = vadd.f32 %v1052, %v1163
    %v1182 = vadd.f32 %v1053, %v1164
    %v1183 = vadd.f32 %v1054, %v1165
    %v1184 = vadd.f32 %v1055, %v1166
    %v1185 = vadd.f32 %v1056, %v1167
    %v1186 = vadd.f32 %v1057, %v1168
    %v1187 = vadd.f32 %v1058, %v1169
    %vm1188 = vcmp.eq.s32.totalorder %v803, 17
    %v1189 = vsel %vm1188, 1, 0
    %vm1190 = vcmp.eq.s32.totalorder %v1189, 1
    %1191 = vset.pattern.permute.xlu0 14
    %1192 = vperm.xlu0 %1191, %v805
    %v1193 = vpop.permute.xlu0 %1192
    %1195 = vset.pattern.permute.xlu0 14
    %1196 = vperm.xlu0 %1195, %v806
    %v1197 = vpop.permute.xlu0 %1196
    %1199 = vset.pattern.permute.xlu0 14
    %1200 = vperm.xlu0 %1199, %v807
    %v1201 = vpop.permute.xlu0 %1200
    %1203 = vset.pattern.permute.xlu0 14
    %1204 = vperm.xlu0 %1203, %v808
    %v1205 = vpop.permute.xlu0 %1204
    %1207 = vset.pattern.permute.xlu0 14
    %1208 = vperm.xlu0 %1207, %v809
    %v1209 = vpop.permute.xlu0 %1208
    %1211 = vset.pattern.permute.xlu0 14
    %1212 = vperm.xlu0 %1211, %v810
    %v1213 = vpop.permute.xlu0 %1212
    %1215 = vset.pattern.permute.xlu0 14
    %1216 = vperm.xlu0 %1215, %v811
    %v1217 = vpop.permute.xlu0 %1216
    %1219 = vset.pattern.permute.xlu0 14
    %1220 = vperm.xlu0 %1219, %v812
    %v1221 = vpop.permute.xlu0 %1220
    %1223 = vset.pattern.permute.xlu0 14
    %1224 = vperm.xlu0 %1223, %v813
    %v1225 = vpop.permute.xlu0 %1224
    %1227 = vset.pattern.permute.xlu0 14
    %1228 = vperm.xlu0 %1227, %v814
    %v1229 = vpop.permute.xlu0 %1228
    %1231 = vset.pattern.permute.xlu0 14
    %1232 = vperm.xlu0 %1231, %v815
    %v1233 = vpop.permute.xlu0 %1232
    %1235 = vset.pattern.permute.xlu0 14
    %1236 = vperm.xlu0 %1235, %v816
    %v1237 = vpop.permute.xlu0 %1236
    %1239 = vset.pattern.permute.xlu0 14
    %1240 = vperm.xlu0 %1239, %v817
    %v1241 = vpop.permute.xlu0 %1240
    %1243 = vset.pattern.permute.xlu0 14
    %1244 = vperm.xlu0 %1243, %v818
    %v1245 = vpop.permute.xlu0 %1244
    %1247 = vset.pattern.permute.xlu0 14
    %1248 = vperm.xlu0 %1247, %v819
    %v1249 = vpop.permute.xlu0 %1248
    %1251 = vset.pattern.permute.xlu0 14
    %1252 = vperm.xlu0 %1251, %v820
    %v1253 = vpop.permute.xlu0 %1252
    %1255 = vset.pattern.permute.xlu0 14
    %1256 = vperm.xlu0 %1255, %v821
    %v1257 = vpop.permute.xlu0 %1256
    %1259 = vset.pattern.permute.xlu0 14
    %1260 = vperm.xlu0 %1259, %v822
    %v1261 = vpop.permute.xlu0 %1260
    %v1263 = vsel %vm1190, %v1193, 0.0
    %v1264 = vsel %vm1190, %v1197, 0.0
    %v1265 = vsel %vm1190, %v1201, 0.0
    %v1266 = vsel %vm1190, %v1205, 0.0
    %v1267 = vsel %vm1190, %v1209, 0.0
    %v1268 = vsel %vm1190, %v1213, 0.0
    %v1269 = vsel %vm1190, %v1217, 0.0
    %v1270 = vsel %vm1190, %v1221, 0.0
    %v1271 = vsel %vm1190, %v1225, 0.0
    %v1272 = vsel %vm1190, %v1229, 0.0
    %v1273 = vsel %vm1190, %v1233, 0.0
    %v1274 = vsel %vm1190, %v1237, 0.0
    %v1275 = vsel %vm1190, %v1241, 0.0
    %v1276 = vsel %vm1190, %v1245, 0.0
    %v1277 = vsel %vm1190, %v1249, 0.0
    %v1278 = vsel %vm1190, %v1253, 0.0
    %v1279 = vsel %vm1190, %v1257, 0.0
    %v1280 = vsel %vm1190, %v1261, 0.0
    %v1281 = vadd.f32 %v1170, %v1263
    %v1282 = vadd.f32 %v1171, %v1264
    %v1283 = vadd.f32 %v1172, %v1265
    %v1284 = vadd.f32 %v1173, %v1266
    %v1285 = vadd.f32 %v1174, %v1267
    %v1286 = vadd.f32 %v1175, %v1268
    %v1287 = vadd.f32 %v1176, %v1269
    %v1288 = vadd.f32 %v1177, %v1270
    %v1289 = vadd.f32 %v1178, %v1271
    %v1290 = vadd.f32 %v1179, %v1272
    %v1291 = vadd.f32 %v1180, %v1273
    %v1292 = vadd.f32 %v1181, %v1274
    %v1293 = vadd.f32 %v1182, %v1275
    %v1294 = vadd.f32 %v1183, %v1276
    %v1295 = vadd.f32 %v1184, %v1277
    %v1296 = vadd.f32 %v1185, %v1278
    %v1297 = vadd.f32 %v1186, %v1279
    %v1298 = vadd.f32 %v1187, %v1280
    %vm1299 = vcmp.eq.s32.totalorder %v803, 18
    %1300 = vrot.lane.b32.xlu0 %v805, 1
    %v1301 = vpop.permute.xlu0 %1300
    %1302 = vrot.lane.b32.xlu0 %v806, 1
    %v1303 = vpop.permute.xlu0 %1302
    %1304 = vrot.lane.b32.xlu0 %v807, 1
    %v1305 = vpop.permute.xlu0 %1304
    %1306 = vrot.lane.b32.xlu0 %v808, 1
    %v1307 = vpop.permute.xlu0 %1306
    %1308 = vrot.lane.b32.xlu0 %v809, 1
    %v1309 = vpop.permute.xlu0 %1308
    %1310 = vrot.lane.b32.xlu0 %v810, 1
    %v1311 = vpop.permute.xlu0 %1310
    %1312 = vrot.lane.b32.xlu0 %v811, 1
    %v1313 = vpop.permute.xlu0 %1312
    %1314 = vrot.lane.b32.xlu0 %v812, 1
    %v1315 = vpop.permute.xlu0 %1314
    %1316 = vrot.lane.b32.xlu0 %v813, 1
    %v1317 = vpop.permute.xlu0 %1316
    %1318 = vrot.lane.b32.xlu0 %v814, 1
    %v1319 = vpop.permute.xlu0 %1318
    %1320 = vrot.lane.b32.xlu0 %v815, 1
    %v1321 = vpop.permute.xlu0 %1320
    %1322 = vrot.lane.b32.xlu0 %v816, 1
    %v1323 = vpop.permute.xlu0 %1322
    %1324 = vrot.lane.b32.xlu0 %v817, 1
    %v1325 = vpop.permute.xlu0 %1324
    %1326 = vrot.lane.b32.xlu0 %v818, 1
    %v1327 = vpop.permute.xlu0 %1326
    %1328 = vrot.lane.b32.xlu0 %v819, 1
    %v1329 = vpop.permute.xlu0 %1328
    %1330 = vrot.lane.b32.xlu0 %v820, 1
    %v1331 = vpop.permute.xlu0 %1330
    %1332 = vrot.lane.b32.xlu0 %v821, 1
    %v1333 = vpop.permute.xlu0 %1332
    %1334 = vrot.lane.b32.xlu0 %v822, 1
    %v1335 = vpop.permute.xlu0 %1334
    %v1354 = vadd.f32 %v823, %v1301
    %v1355 = vadd.f32 %v824, %v1303
    %v1356 = vadd.f32 %v825, %v1305
    %v1357 = vadd.f32 %v826, %v1307
    %v1358 = vadd.f32 %v827, %v1309
    %v1359 = vadd.f32 %v828, %v1311
    %v1360 = vadd.f32 %v829, %v1313
    %v1361 = vadd.f32 %v830, %v1315
    %v1362 = vadd.f32 %v831, %v1317
    %v1363 = vadd.f32 %v832, %v1319
    %v1364 = vadd.f32 %v833, %v1321
    %v1365 = vadd.f32 %v834, %v1323
    %v1366 = vadd.f32 %v835, %v1325
    %v1367 = vadd.f32 %v836, %v1327
    %v1368 = vadd.f32 %v837, %v1329
    %v1369 = vadd.f32 %v838, %v1331
    %v1370 = vadd.f32 %v839, %v1333
    %v1371 = vadd.f32 %v840, %v1335
    %v1372 = vsel %vm1299, 1, 0
    %vm1373 = vcmp.eq.s32.totalorder %v1372, 1
    %1375 = vset.pattern.permute.xlu0 14
    %1376 = vperm.xlu0 %1375, %v1354
    %v1377 = vpop.permute.xlu0 %1376
    %1380 = vset.pattern.permute.xlu0 14
    %1381 = vperm.xlu0 %1380, %v1355
    %v1382 = vpop.permute.xlu0 %1381
    %1385 = vset.pattern.permute.xlu0 14
    %1386 = vperm.xlu0 %1385, %v1356
    %v1387 = vpop.permute.xlu0 %1386
    %1390 = vset.pattern.permute.xlu0 14
    %1391 = vperm.xlu0 %1390, %v1357
    %v1392 = vpop.permute.xlu0 %1391
    %1395 = vset.pattern.permute.xlu0 14
    %1396 = vperm.xlu0 %1395, %v1358
    %v1397 = vpop.permute.xlu0 %1396
    %1400 = vset.pattern.permute.xlu0 14
    %1401 = vperm.xlu0 %1400, %v1359
    %v1402 = vpop.permute.xlu0 %1401
    %1405 = vset.pattern.permute.xlu0 14
    %1406 = vperm.xlu0 %1405, %v1360
    %v1407 = vpop.permute.xlu0 %1406
    %1410 = vset.pattern.permute.xlu0 14
    %1411 = vperm.xlu0 %1410, %v1361
    %v1412 = vpop.permute.xlu0 %1411
    %1415 = vset.pattern.permute.xlu0 14
    %1416 = vperm.xlu0 %1415, %v1362
    %v1417 = vpop.permute.xlu0 %1416
    %1420 = vset.pattern.permute.xlu0 14
    %1421 = vperm.xlu0 %1420, %v1363
    %v1422 = vpop.permute.xlu0 %1421
    %1425 = vset.pattern.permute.xlu0 14
    %1426 = vperm.xlu0 %1425, %v1364
    %v1427 = vpop.permute.xlu0 %1426
    %1430 = vset.pattern.permute.xlu0 14
    %1431 = vperm.xlu0 %1430, %v1365
    %v1432 = vpop.permute.xlu0 %1431
    %1435 = vset.pattern.permute.xlu0 14
    %1436 = vperm.xlu0 %1435, %v1366
    %v1437 = vpop.permute.xlu0 %1436
    %1440 = vset.pattern.permute.xlu0 14
    %1441 = vperm.xlu0 %1440, %v1367
    %v1442 = vpop.permute.xlu0 %1441
    %1445 = vset.pattern.permute.xlu0 14
    %1446 = vperm.xlu0 %1445, %v1368
    %v1447 = vpop.permute.xlu0 %1446
    %1450 = vset.pattern.permute.xlu0 14
    %1451 = vperm.xlu0 %1450, %v1369
    %v1452 = vpop.permute.xlu0 %1451
    %1455 = vset.pattern.permute.xlu0 14
    %1456 = vperm.xlu0 %1455, %v1370
    %v1457 = vpop.permute.xlu0 %1456
    %1460 = vset.pattern.permute.xlu0 14
    %1461 = vperm.xlu0 %1460, %v1371
    %v1462 = vpop.permute.xlu0 %1461
    %v1464 = vsel %vm1373, %v1377, 0.0
    %v1465 = vsel %vm1373, %v1382, 0.0
    %v1466 = vsel %vm1373, %v1387, 0.0
    %v1467 = vsel %vm1373, %v1392, 0.0
    %v1468 = vsel %vm1373, %v1397, 0.0
    %v1469 = vsel %vm1373, %v1402, 0.0
    %v1470 = vsel %vm1373, %v1407, 0.0
    %v1471 = vsel %vm1373, %v1412, 0.0
    %v1472 = vsel %vm1373, %v1417, 0.0
    %v1473 = vsel %vm1373, %v1422, 0.0
    %v1474 = vsel %vm1373, %v1427, 0.0
    %v1475 = vsel %vm1373, %v1432, 0.0
    %v1476 = vsel %vm1373, %v1437, 0.0
    %v1477 = vsel %vm1373, %v1442, 0.0
    %v1478 = vsel %vm1373, %v1447, 0.0
    %v1479 = vsel %vm1373, %v1452, 0.0
    %v1480 = vsel %vm1373, %v1457, 0.0
    %v1481 = vsel %vm1373, %v1462, 0.0
    %v1482 = vadd.f32 %v1281, %v1464
    %v1483 = vadd.f32 %v1282, %v1465
    %v1484 = vadd.f32 %v1283, %v1466
    %v1485 = vadd.f32 %v1284, %v1467
    %v1486 = vadd.f32 %v1285, %v1468
    %v1487 = vadd.f32 %v1286, %v1469
    %v1488 = vadd.f32 %v1287, %v1470
    %v1489 = vadd.f32 %v1288, %v1471
    %v1490 = vadd.f32 %v1289, %v1472
    %v1491 = vadd.f32 %v1290, %v1473
    %v1492 = vadd.f32 %v1291, %v1474
    %v1493 = vadd.f32 %v1292, %v1475
    %v1494 = vadd.f32 %v1293, %v1476
    %v1495 = vadd.f32 %v1294, %v1477
    %v1496 = vadd.f32 %v1295, %v1478
    %v1497 = vadd.f32 %v1296, %v1479
    %v1498 = vadd.f32 %v1297, %v1480
    %v1499 = vadd.f32 %v1298, %v1481
    %1500 = vst [vmem:[#allocation5] sm:$0xff] %v1482
    %1501 = vst [vmem:[#allocation5 + $0x8] sm:$0xff] %v1483
    %1502 = vst [vmem:[#allocation5 + $0x10] sm:$0xff] %v1484
    %1503 = vst [vmem:[#allocation5 + $0x18] sm:$0xff] %v1485
    %1504 = vst [vmem:[#allocation5 + $0x20] sm:$0xff] %v1486
    %1505 = vst [vmem:[#allocation5 + $0x28] sm:$0xff] %v1487
    %1506 = vst [vmem:[#allocation5 + $0x30] sm:$0xff] %v1488
    %1507 = vst [vmem:[#allocation5 + $0x38] sm:$0xff] %v1489
    %1508 = vst [vmem:[#allocation5 + $0x40] sm:$0xff] %v1490
    %1509 = vst [vmem:[#allocation5 + $0x48] sm:$0xff] %v1491
    %1510 = vst [vmem:[#allocation5 + $0x50] sm:$0xff] %v1492
    %1511 = vst [vmem:[#allocation5 + $0x58] sm:$0xff] %v1493
    %1512 = vst [vmem:[#allocation5 + $0x60] sm:$0xff] %v1494
    %1513 = vst [vmem:[#allocation5 + $0x68] sm:$0xff] %v1495
    %1514 = vst [vmem:[#allocation5 + $0x70] sm:$0xff] %v1496
    %1515 = vst [vmem:[#allocation5 + $0x78] sm:$0xff] %v1497
    %1516 = vst [vmem:[#allocation5 + $0x80] sm:$0xff] %v1498
    %1517 = vst [vmem:[#allocation5 + $0x88] sm:$0xff] %v1499
    // Predicated region
    $region10: #{tpu_custom_call.1} parent=1 // pred_check
      _
    $region11: #{tpu_custom_call.1} parent=1 // pred_check_branch
      %1519 = sbr.rel (0) target = $region13
    $region12: #{tpu_custom_call.1} parent=1 // pred_region
      %1521 = vsyncadd [#allocation4], 0
      %s1522 = sshll.u32 [#allocation5], 4
      %s1523 = int_to_ptr.vmem [resolvable:$true] %s1522
      %s1524 = sshll.u32 %s1, 4
      %s1525 = int_to_ptr.hbm [resolvable:$true] %s1524
      %1530 = dma.vmem_to_hbm [thread:$0]  %s1523, 2304, %s1525, [#allocation4], 128, 128, 8
    $region13: #{tpu_custom_call.1} parent=1 // pred_fallthru
      _
    // Predicated region
    $region14: #{tpu_custom_call.1} parent=1 // pred_check
      _
    $region15: #{tpu_custom_call.1} parent=1 // pred_check_branch
      %1532 = sbr.rel (0) target = $region17
    $region16: #{tpu_custom_call.1} parent=1 // pred_region
      %1534 = dma.done [#allocation4], 2304
    $region17: #{tpu_custom_call.1} parent=1 // pred_fallthru
      _
    %1535 = vsyncpa [#allocation3], 1
    %1536 = vsyncpa [#allocation4], 1

</llo_original>
